<compile_context>
chip_gen: v7x
topology: tpu7x:2x2x1
jax: 0.10.0
libtpu: 0.0.40
codegen_flags: <defaults>
</compile_context>

<pallas_src>
import functools

import jax
import jax.numpy as jnp
from jax import lax
from jax.experimental import pallas as pl
from jax.experimental.pallas import tpu as pltpu

_LANE = 128   # boxes per row (lane axis)
_SUB = 8      # sublane granule


def _iou_loss_body(x_ref, loss_type):
    """Per-box loss on one (8, tile_r, 128) coord-major block -> (tile_r, 128) f32."""
    f32 = jnp.float32
    p_cx, p_cy = x_ref[0].astype(f32), x_ref[1].astype(f32)
    p_w, p_h = x_ref[2].astype(f32), x_ref[3].astype(f32)
    t_cx, t_cy = x_ref[4].astype(f32), x_ref[5].astype(f32)
    t_w, t_h = x_ref[6].astype(f32), x_ref[7].astype(f32)

    p_hw, p_hh = p_w * 0.5, p_h * 0.5
    t_hw, t_hh = t_w * 0.5, t_h * 0.5

    tl_x = jnp.maximum(p_cx - p_hw, t_cx - t_hw)
    tl_y = jnp.maximum(p_cy - p_hh, t_cy - t_hh)
    br_x = jnp.minimum(p_cx + p_hw, t_cx + t_hw)
    br_y = jnp.minimum(p_cy + p_hh, t_cy + t_hh)

    area_p = p_w * p_h
    area_g = t_w * t_h
    area_i = jnp.where((tl_x < br_x) & (tl_y < br_y),
                       (br_x - tl_x) * (br_y - tl_y), 0.0)
    area_u = area_p + area_g - area_i
    iou = area_i / (area_u + 1e-16)

    if loss_type == "iou":
        return 1.0 - iou * iou

    # giou
    c_tl_x = jnp.minimum(p_cx - p_hw, t_cx - t_hw)
    c_tl_y = jnp.minimum(p_cy - p_hh, t_cy - t_hh)
    c_br_x = jnp.maximum(p_cx + p_hw, t_cx + t_hw)
    c_br_y = jnp.maximum(p_cy + p_hh, t_cy + t_hh)
    area_c = (c_br_x - c_tl_x) * (c_br_y - c_tl_y)
    giou = iou - (area_c - area_u) / jnp.maximum(area_c, 1e-16)
    return 1.0 - jnp.clip(giou, -1.0, 1.0)


def _iou_loss_kernel(x_ref, out_ref, *, loss_type):
    # Dense (tile_r, 128) per-box loss block (reduction='none' path).
    out_ref[...] = _iou_loss_body(x_ref, loss_type)


def _iou_loss_partial_sum_kernel(x_ref, out_ref, *, loss_type, n_valid, tile_r):
    # Per-grid-step partial sum (reduction='mean'/'sum' path): tiny lane-dense
    # (8, 128) output per block, padded-tail boxes masked out in-kernel.
    loss = _iou_loss_body(x_ref, loss_type)                          # (tile_r, 128)
    row = lax.broadcasted_iota(jnp.int32, (tile_r, _LANE), 0)
    lane = lax.broadcasted_iota(jnp.int32, (tile_r, _LANE), 1)
    box = (pl.program_id(0) * tile_r + row) * _LANE + lane
    loss = jnp.where(box < n_valid, loss, 0.0)                       # mask pad tail
    part = jnp.sum(loss, axis=0, keepdims=True)                      # (1, 128)
    rows8 = lax.broadcasted_iota(jnp.int32, (_SUB, _LANE), 0)
    out_ref[...] = jnp.where(rows8 == 0,
                             jnp.broadcast_to(part, (_SUB, _LANE)), 0.0)


def pack_boxes(pred, target, *, max_tile_rows=1024):
    """Box-major (n, 4) pred/target -> coord-major (8, r_pad, 128) slab.

    rows 0..3 = pred (cx, cy, w, h), rows 4..7 = target; box b -> (row b//128,
    lane b%128).  This is the kernel's native input: hoist this packing into
    the op that produces pred/target so it fuses upstream and the standalone
    repack HBM pass disappears (perf-review item 1b).
    Returns (slab, n, tile_r).
    """
    pred = pred.reshape(-1, 4)
    target = target.reshape(-1, 4)
    assert pred.shape[0] == target.shape[0]
    n = pred.shape[0]

    # bf16 inputs stay bf16 on the wire (half the HBM read); math is f32 in-kernel.
    if pred.dtype == jnp.bfloat16 and target.dtype == jnp.bfloat16:
        feed = jnp.bfloat16
    else:
        feed = jnp.float32
    pred = pred.astype(feed)
    target = target.astype(feed)

    r_total = max(pl.cdiv(n, _LANE), 1)
    r_total = pl.cdiv(r_total, _SUB) * _SUB                 # multiple of 8 rows
    if r_total <= max_tile_rows:
        tile_r = r_total
        r_pad = r_total
    else:
        tile_r = max(_SUB, (max_tile_rows // _SUB) * _SUB)
        r_pad = pl.cdiv(r_total, tile_r) * tile_r
    n_pad = r_pad * _LANE

    # Single fused pad + layout pass: (n,4)+(n,4) -> (8, r_pad, 128).
    x = jnp.concatenate([pred, target], axis=1)             # (n, 8)
    x = jnp.pad(x, ((0, n_pad - n), (0, 0)))                # (n_pad, 8), zero pad
    x = x.T.reshape(8, r_pad, _LANE)                        # coord-major slab
    return x, n, tile_r


def iou_loss_packed(x, n, tile_r, *, reduction="none", loss_type="iou"):
    """IOUloss forward on a pre-packed (8, r_pad, 128) coord-major slab."""
    if loss_type not in ("iou", "giou"):
        raise ValueError(f"unknown loss_type {loss_type}")
    _, r_pad, _ = x.shape
    num_blocks = r_pad // tile_r
    in_bytes = x.size * x.dtype.itemsize

    cparams = pltpu.CompilerParams(
        dimension_semantics=("parallel",),       # shards the grid across v7x's 2 TCs
        vmem_limit_bytes=32 * 1024 * 1024,       # 1024-row tiles fit on v5e too
    )
    in_spec = pl.BlockSpec((8, tile_r, _LANE), lambda i: (0, i, 0))

    if reduction in ("mean", "sum"):
        kernel = functools.partial(_iou_loss_partial_sum_kernel,
                                   loss_type=loss_type, n_valid=n, tile_r=tile_r)
        parts = pl.pallas_call(
            kernel,
            out_shape=jax.ShapeDtypeStruct((num_blocks * _SUB, _LANE), jnp.float32),
            grid=(num_blocks,),
            in_specs=[in_spec],
            out_specs=pl.BlockSpec((_SUB, _LANE), lambda i: (i, 0)),
            compiler_params=cparams,
            cost_estimate=pl.CostEstimate(
                flops=40 * r_pad * _LANE, transcendentals=0,
                bytes_accessed=in_bytes + num_blocks * _SUB * _LANE * 4),
        )(x)
        total = jnp.sum(parts)
        return total / n if reduction == "mean" else total

    # reduction == 'none' (or anything else, matching the torch fall-through)
    kernel = functools.partial(_iou_loss_kernel, loss_type=loss_type)
    out = pl.pallas_call(
        kernel,
        out_shape=jax.ShapeDtypeStruct((r_pad, _LANE), jnp.float32),
        grid=(num_blocks,),
        in_specs=[in_spec],
        out_specs=pl.BlockSpec((tile_r, _LANE), lambda i: (i, 0)),
        compiler_params=cparams,
        cost_estimate=pl.CostEstimate(
            flops=40 * r_pad * _LANE, transcendentals=0,
            bytes_accessed=in_bytes + r_pad * _LANE * 4),
    )(x)
    return out.reshape(-1)[:n]


def iou_loss(pred, target, *, reduction="none", loss_type="iou",
             max_tile_rows=1024):
    """Drop-in IOUloss forward for box-major (n, 4) pred/target."""
    assert pred.shape[0] == target.shape[0]
    x, n, tile_r = pack_boxes(pred, target, max_tile_rows=max_tile_rows)
    return iou_loss_packed(x, n, tile_r, reduction=reduction, loss_type=loss_type)


def _iou_loss_ref(pred, target, reduction="none", loss_type="iou"):
    """Pure-JAX reference mirroring the PyTorch module, for validation."""
    pred = pred.reshape(-1, 4).astype(jnp.float32)
    target = target.reshape(-1, 4).astype(jnp.float32)
    tl = jnp.maximum(pred[:, :2] - pred[:, 2:] / 2, target[:, :2] - target[:, 2:] / 2)
    br = jnp.minimum(pred[:, :2] + pred[:, 2:] / 2, target[:, :2] + target[:, 2:] / 2)
    area_p = jnp.prod(pred[:, 2:], axis=1)
    area_g = jnp.prod(target[:, 2:], axis=1)
    en = jnp.prod((tl < br).astype(tl.dtype), axis=1)
    area_i = jnp.prod(br - tl, axis=1) * en
    area_u = area_p + area_g - area_i
    iou = area_i / (area_u + 1e-16)
    if loss_type == "iou":
        loss = 1 - iou ** 2
    else:
        c_tl = jnp.minimum(pred[:, :2] - pred[:, 2:] / 2, target[:, :2] - target[:, 2:] / 2)
        c_br = jnp.maximum(pred[:, :2] + pred[:, 2:] / 2, target[:, :2] + target[:, 2:] / 2)
        area_c = jnp.prod(c_br - c_tl, axis=1)
        giou = iou - (area_c - area_u) / jnp.maximum(area_c, 1e-16)
        loss = 1 - jnp.clip(giou, -1.0, 1.0)
    if reduction == "mean":
        loss = loss.mean()
    elif reduction == "sum":
        loss = loss.sum()
    return loss


if __name__ == "__main__":
    key = jax.random.PRNGKey(0)

    def make_boxes(k, n):
        kc, kw = jax.random.split(k)
        c = jax.random.uniform(kc, (n, 2), jnp.float32, minval=0.0, maxval=10.0)
        wh = jax.random.uniform(kw, (n, 2), jnp.float32, minval=0.5, maxval=5.0)
        return jnp.concatenate([c, wh], axis=1)

    ok = True
    # 16 boxes = tiny spec-sized case; 300 exercises lane padding + tail masking.
    for n_boxes in (16, 300):
        kp, kt, key = jax.random.split(key, 3)
        pred = make_boxes(kp, n_boxes)
        target = make_boxes(kt, n_boxes)
        for loss_type in ("iou", "giou"):
            for reduction in ("none", "mean", "sum"):
                out = iou_loss(pred, target, reduction=reduction, loss_type=loss_type)
                out = jax.block_until_ready(out)
                ref = _iou_loss_ref(pred, target, reduction=reduction, loss_type=loss_type)
                if not jnp.allclose(out, ref, rtol=1e-5, atol=1e-4):
                    ok = False
                    print(f"MISMATCH n={n_boxes} loss_type={loss_type} "
                          f"reduction={reduction}")

    if ok:
        print("KERNEL_OK")
</pallas_src>

<mosaic_0001>
module attributes {stable_mosaic.version = 11 : i64} {
  func.func @_iou_loss_kernel(%arg0: i32, %arg1: memref<8x8x128xf32, #tpu.memory_space<vmem>>, %arg2: memref<8x128xf32, #tpu.memory_space<vmem>>) attributes {dimension_semantics = [#tpu.dimension_semantics<parallel>], iteration_bounds = array<i64: 1>, scalar_prefetch = 0 : i64, scratch_operands = 0 : i64, tpu.core_type = #tpu.core_type<tc>, window_params = [{transform_indices = @transform_0, window_bounds = array<i64: 8, 8, 128>}, {transform_indices = @transform_1, window_bounds = array<i64: 8, 128>}]} {
    %c0 = arith.constant 0 : index
    %c0_0 = arith.constant 0 : index
    %c0_1 = arith.constant 0 : index
    %0 = vector.load %arg1[%c0, %c0_0, %c0_1] : memref<8x8x128xf32, #tpu.memory_space<vmem>>, vector<1x8x128xf32>
    %1 = vector.shape_cast %0 : vector<1x8x128xf32> to vector<8x128xf32>
    %c1 = arith.constant 1 : index
    %c0_2 = arith.constant 0 : index
    %c0_3 = arith.constant 0 : index
    %2 = vector.load %arg1[%c1, %c0_2, %c0_3] : memref<8x8x128xf32, #tpu.memory_space<vmem>>, vector<1x8x128xf32>
    %3 = vector.shape_cast %2 : vector<1x8x128xf32> to vector<8x128xf32>
    %c2 = arith.constant 2 : index
    %c0_4 = arith.constant 0 : index
    %c0_5 = arith.constant 0 : index
    %4 = vector.load %arg1[%c2, %c0_4, %c0_5] : memref<8x8x128xf32, #tpu.memory_space<vmem>>, vector<1x8x128xf32>
    %5 = vector.shape_cast %4 : vector<1x8x128xf32> to vector<8x128xf32>
    %c3 = arith.constant 3 : index
    %c0_6 = arith.constant 0 : index
    %c0_7 = arith.constant 0 : index
    %6 = vector.load %arg1[%c3, %c0_6, %c0_7] : memref<8x8x128xf32, #tpu.memory_space<vmem>>, vector<1x8x128xf32>
    %7 = vector.shape_cast %6 : vector<1x8x128xf32> to vector<8x128xf32>
    %c4 = arith.constant 4 : index
    %c0_8 = arith.constant 0 : index
    %c0_9 = arith.constant 0 : index
    %8 = vector.load %arg1[%c4, %c0_8, %c0_9] : memref<8x8x128xf32, #tpu.memory_space<vmem>>, vector<1x8x128xf32>
    %9 = vector.shape_cast %8 : vector<1x8x128xf32> to vector<8x128xf32>
    %c5 = arith.constant 5 : index
    %c0_10 = arith.constant 0 : index
    %c0_11 = arith.constant 0 : index
    %10 = vector.load %arg1[%c5, %c0_10, %c0_11] : memref<8x8x128xf32, #tpu.memory_space<vmem>>, vector<1x8x128xf32>
    %11 = vector.shape_cast %10 : vector<1x8x128xf32> to vector<8x128xf32>
    %c6 = arith.constant 6 : index
    %c0_12 = arith.constant 0 : index
    %c0_13 = arith.constant 0 : index
    %12 = vector.load %arg1[%c6, %c0_12, %c0_13] : memref<8x8x128xf32, #tpu.memory_space<vmem>>, vector<1x8x128xf32>
    %13 = vector.shape_cast %12 : vector<1x8x128xf32> to vector<8x128xf32>
    %c7 = arith.constant 7 : index
    %c0_14 = arith.constant 0 : index
    %c0_15 = arith.constant 0 : index
    %14 = vector.load %arg1[%c7, %c0_14, %c0_15] : memref<8x8x128xf32, #tpu.memory_space<vmem>>, vector<1x8x128xf32>
    %15 = vector.shape_cast %14 : vector<1x8x128xf32> to vector<8x128xf32>
    %cst = arith.constant 5.000000e-01 : f32
    %16 = vector.broadcast %cst : f32 to vector<8x128xf32>
    %17 = arith.mulf %5, %16 : vector<8x128xf32>
    %cst_16 = arith.constant 5.000000e-01 : f32
    %18 = vector.broadcast %cst_16 : f32 to vector<8x128xf32>
    %19 = arith.mulf %7, %18 : vector<8x128xf32>
    %cst_17 = arith.constant 5.000000e-01 : f32
    %20 = vector.broadcast %cst_17 : f32 to vector<8x128xf32>
    %21 = arith.mulf %13, %20 : vector<8x128xf32>
    %cst_18 = arith.constant 5.000000e-01 : f32
    %22 = vector.broadcast %cst_18 : f32 to vector<8x128xf32>
    %23 = arith.mulf %15, %22 : vector<8x128xf32>
    %24 = arith.subf %1, %17 : vector<8x128xf32>
    %25 = arith.subf %9, %21 : vector<8x128xf32>
    %26 = arith.maximumf %24, %25 : vector<8x128xf32>
    %27 = arith.subf %3, %19 : vector<8x128xf32>
    %28 = arith.subf %11, %23 : vector<8x128xf32>
    %29 = arith.maximumf %27, %28 : vector<8x128xf32>
    %30 = arith.addf %1, %17 : vector<8x128xf32>
    %31 = arith.addf %9, %21 : vector<8x128xf32>
    %32 = arith.minimumf %30, %31 : vector<8x128xf32>
    %33 = arith.addf %3, %19 : vector<8x128xf32>
    %34 = arith.addf %11, %23 : vector<8x128xf32>
    %35 = arith.minimumf %33, %34 : vector<8x128xf32>
    %36 = arith.mulf %5, %7 : vector<8x128xf32>
    %37 = arith.mulf %13, %15 : vector<8x128xf32>
    %38 = arith.cmpf olt, %26, %32 : vector<8x128xf32>
    %39 = arith.cmpf olt, %29, %35 : vector<8x128xf32>
    %40 = arith.andi %38, %39 : vector<8x128xi1>
    %41 = arith.subf %32, %26 : vector<8x128xf32>
    %42 = arith.subf %35, %29 : vector<8x128xf32>
    %43 = arith.mulf %41, %42 : vector<8x128xf32>
    %cst_19 = arith.constant 0.000000e+00 : f32
    %44 = vector.broadcast %cst_19 : f32 to vector<8x128xf32>
    %45 = arith.select %40, %43, %44 : vector<8x128xi1>, vector<8x128xf32>
    %46 = arith.addf %36, %37 : vector<8x128xf32>
    %47 = arith.subf %46, %45 : vector<8x128xf32>
    %cst_20 = arith.constant 1.000000e-16 : f32
    %48 = vector.broadcast %cst_20 : f32 to vector<8x128xf32>
    %49 = arith.addf %47, %48 : vector<8x128xf32>
    %50 = arith.divf %45, %49 : vector<8x128xf32>
    %51 = arith.mulf %50, %50 : vector<8x128xf32>
    %cst_21 = arith.constant 1.000000e+00 : f32
    %52 = vector.broadcast %cst_21 : f32 to vector<8x128xf32>
    %53 = arith.subf %52, %51 : vector<8x128xf32>
    %c0_22 = arith.constant 0 : index
    %c0_23 = arith.constant 0 : index
    %54 = vector.load %arg2[%c0_22, %c0_23] : memref<8x128xf32, #tpu.memory_space<vmem>>, vector<8x128xf32>
    tpu.vector_store %arg2[%c0_22, %c0_23], %53 {strides = array<i32>} : memref<8x128xf32, #tpu.memory_space<vmem>>, vector<8x128xf32>,
    return
  }
  func.func @transform_0(%arg0: i32) -> (i32, i32, i32) {
    %c0_i32 = arith.constant 0 : i32
    %c0_i32_0 = arith.constant 0 : i32
    %c0_i32_1 = arith.constant 0 : i32
    return %c0_i32, %arg0, %c0_i32_0 : i32, i32, i32
  }
  func.func @transform_1(%arg0: i32) -> (i32, i32) {
    %c0_i32 = arith.constant 0 : i32
    %c0_i32_0 = arith.constant 0 : i32
    return %arg0, %c0_i32 : i32, i32
  }
}

</mosaic_0001>

<llo_original>
// kernel: tpu_custom_call.1
$region0: #{tpu_custom_call.1}
  #allocation0 [shape = 'u32[]', space=smem, size = 0x4, offset = 0x4, fixed_abs, tag = 'smem constant byte address 0x4 - core index']
  #allocation1 [shape = 'u32[144,128]{1,0:T(1,128)}', space=vmem, size = 0x12000, scoped, tag = 'internal scratch']
  %s0 = inlined_call_operand.hbm [shape: f32[8,8,128], index: 0, kind: input, shape index: {}]
  %s1 = inlined_call_operand.hbm [shape: f32[8,128], index: 1, kind: output, shape index: {}]
  %s2 = sld [smem:[#allocation0]]
  $region18: #{tpu_custom_call.1} parent=0
    _
  %s4 = ssub.s32 1, %s2
  %s5 = scalar_select 0, %s4, %s2
  $region1: #{tpu_custom_call.1} parent=0
    #allocation2 [shape = 'u8[32768]{0}', space=vmem, size = 0x8000, scoped, tag = 'input window, operand 0, single buffered']
    #allocation3 [shape = 's32[1]{0}', space=sflag, size = 0x4, scoped, tag = 'scoped memory for tpu_custom_call.1']
    #allocation4 [shape = 's32[1]{0}', space=sflag, size = 0x4, scoped, tag = 'scoped memory for tpu_custom_call.1']
    #allocation5 [shape = 'u8[4096]{0}', space=vmem, size = 0x1000, scoped, tag = 'output window, operand 0, single buffered']
    %6 = vsyncpa [#allocation3], 0
    %7 = vsyncpa [#allocation4], 0
    // Predicated region
    $region2: #{tpu_custom_call.1} parent=1 // pred_check
      _
    $region3: #{tpu_custom_call.1} parent=1 // pred_check_branch
      %9 = sbr.rel (0) target = $region5
    $region4: #{tpu_custom_call.1} parent=1 // pred_region
      %s11 = ssub.s32 1024, 1024
      %12 = vsyncadd [#allocation3], %s11
      %s13 = sshll.u32 [#allocation2], 4
      %s14 = int_to_ptr.vmem [resolvable:$true] %s13
      %19 = dma.hbm_to_vmem [thread:$0]  %s0, 1024, %s14, [#allocation3], 128, 128, 8
    $region5: #{tpu_custom_call.1} parent=1 // pred_fallthru
      _
    // Predicated region
    $region6: #{tpu_custom_call.1} parent=1 // pred_check
      _
    $region7: #{tpu_custom_call.1} parent=1 // pred_check_branch
      %21 = sbr.rel (0) target = $region9
    $region8: #{tpu_custom_call.1} parent=1 // pred_region
      %22 = dma.done [#allocation3], 1024
    $region9: #{tpu_custom_call.1} parent=1 // pred_fallthru
      _
    %v23 = vld [vmem:[#allocation2] sm:$0xff]
    %s24 = scalar_lea.vmem [#allocation2], 8
    %v25 = vld [vmem:[%s24] sm:$0xff]
    %s26 = scalar_lea.vmem [#allocation2], 16
    %v27 = vld [vmem:[%s26] sm:$0xff]
    %s28 = scalar_lea.vmem [#allocation2], 24
    %v29 = vld [vmem:[%s28] sm:$0xff]
    %s30 = scalar_lea.vmem [#allocation2], 32
    %v31 = vld [vmem:[%s30] sm:$0xff]
    %s32 = scalar_lea.vmem [#allocation2], 40
    %v33 = vld [vmem:[%s32] sm:$0xff]
    %s34 = scalar_lea.vmem [#allocation2], 48
    %v35 = vld [vmem:[%s34] sm:$0xff]
    %s36 = scalar_lea.vmem [#allocation2], 56
    %v37 = vld [vmem:[%s36] sm:$0xff]
    %v38 = vmul.f32 %v27, 0.5
    %v39 = vmul.f32 %v29, 0.5
    %v40 = vmul.f32 %v35, 0.5
    %v41 = vmul.f32 %v37, 0.5
    %v42 = vsub.f32 %v23, %v38
    %v43 = vsub.f32 %v31, %v40
    %v44 = vmax.f32 %v42, %v43
    %v45 = vsub.f32 %v25, %v39
    %v46 = vsub.f32 %v33, %v41
    %v47 = vmax.f32 %v45, %v46
    %v48 = vadd.f32 %v23, %v38
    %v49 = vadd.f32 %v31, %v40
    %v50 = vmin.f32 %v48, %v49
    %v51 = vadd.f32 %v25, %v39
    %v52 = vadd.f32 %v33, %v41
    %v53 = vmin.f32 %v51, %v52
    %v54 = vmul.f32 %v27, %v29
    %v55 = vmul.f32 %v35, %v37
    %vm56 = vcmp.lt.f32.partialorder %v44, %v50
    %vm57 = vcmp.lt.f32.partialorder %v47, %v53
    %vm58 = vmand %vm56, %vm57
    %v59 = vsub.f32 %v50, %v44
    %v60 = vsub.f32 %v53, %v47
    %v61 = vmul.f32 %v59, %v60
    %v62 = vsel %vm58, %v61, 0.0
    %v63 = vadd.f32 %v54, %v55
    %v64 = vsub.f32 %v63, %v62
    %v65 = vadd.f32 %v64, 1e-16
    %v66 = vrcp.pop %v65
    %v67 = vmul.f32 %v62, %v66
    %v68 = vmul.f32 %v67, %v67
    %v69 = vsub.f32 1.0, %v68
    %70 = vst [vmem:[#allocation5] sm:$0xff] %v69
    // Predicated region
    $region10: #{tpu_custom_call.1} parent=1 // pred_check
      _
    $region11: #{tpu_custom_call.1} parent=1 // pred_check_branch
      %72 = sbr.rel (0) target = $region13
    $region12: #{tpu_custom_call.1} parent=1 // pred_region
      %s74 = ssub.s32 128, 128
      %75 = vsyncadd [#allocation4], %s74
      %s77 = sshll.u32 [#allocation5], 4
      %s78 = int_to_ptr.vmem [resolvable:$true] %s77
      %80 = dma.vmem_to_hbm [thread:$0]  %s78, 128, %s1, [#allocation4]
    $region13: #{tpu_custom_call.1} parent=1 // pred_fallthru
      _
    // Predicated region
    $region14: #{tpu_custom_call.1} parent=1 // pred_check
      _
    $region15: #{tpu_custom_call.1} parent=1 // pred_check_branch
      %82 = sbr.rel (0) target = $region17
    $region16: #{tpu_custom_call.1} parent=1 // pred_region
      %83 = dma.done [#allocation4], 128
    $region17: #{tpu_custom_call.1} parent=1 // pred_fallthru
      _
    %84 = vsyncpa [#allocation3], 1
    %85 = vsyncpa [#allocation4], 1

</llo_original>
